<compile_context>
chip_gen: v6e
topology: v6e:2x2x1
jax: 0.10.0
libtpu: 0.0.40
codegen_flags: <defaults>
</compile_context>

<pallas_src>
import jax
import jax.numpy as jnp
from jax.experimental import pallas as pl
from jax.experimental.pallas import tpu as pltpu


def _pick_tile(dim, max_tile, align):
    """Largest tile <= max_tile that is the full dim or an `align`-multiple divisor."""
    if dim <= max_tile:
        return dim
    t = (max_tile // align) * align
    while t >= align:
        if dim % t == 0:
            return t
        t -= align
    return dim  # no aligned divisor: fall back to the full (untiled) dimension


def label_smoothing_loss(lsm, target, n_classes, smoothing=0.0,
                         max_tb=256, max_tc=2048):
    """Pallas implementation of LabelSmoothingLoss.forward(lsm, target)."""
    confidence = 1.0 - smoothing
    smooth_val = smoothing / (n_classes - 1)
    B, C = lsm.shape
    tgt2d = target.astype(jnp.int32).reshape(B, 1)

    tb = _pick_tile(B, max_tb, 8)     # sublane-aligned batch tile
    tc = _pick_tile(C, max_tc, 128)   # lane-aligned class tile
    nb = B // tb
    nc = C // tc

    def kernel(lsm_ref, tgt_ref, out_ref, acc_ref):
        ci = pl.program_id(1)

        @pl.when(ci == 0)
        def _init():
            acc_ref[0] = jnp.float32(0.0)   # sum over all classes
            acc_ref[1] = jnp.float32(0.0)   # sum over target classes

        lsm_v = lsm_ref[...].astype(jnp.float32)          # [tb, tc], upcast in-kernel
        tgt_v = tgt_ref[...]                              # [tb, 1] int32
        col = jax.lax.broadcasted_iota(jnp.int32, (tb, tc), 1) + ci * tc

        # Bulk term: plain reduction.  Target term: one select + reduction.
        acc_ref[0] = acc_ref[0] + jnp.sum(lsm_v)
        acc_ref[1] = acc_ref[1] + jnp.sum(
            jnp.where(col == tgt_v, lsm_v, jnp.float32(0.0)))

        @pl.when(ci == pl.num_programs(1) - 1)
        def _finalize():
            out_ref[0, 0] = (-jnp.float32(smooth_val)) * acc_ref[0] \
                - jnp.float32(confidence - smooth_val) * acc_ref[1]

    partials = pl.pallas_call(
        kernel,
        out_shape=jax.ShapeDtypeStruct((nb, 1), jnp.float32),
        grid_spec=pltpu.PrefetchScalarGridSpec(
            num_scalar_prefetch=0,
            grid=(nb, nc),
            in_specs=[
                pl.BlockSpec((tb, tc), lambda bi, ci: (bi, ci)),   # lsm tile
                pl.BlockSpec((tb, 1), lambda bi, ci: (bi, 0)),     # target tile
            ],
            out_specs=pl.BlockSpec((1, 1), lambda bi, ci: (bi, 0),
                                   memory_space=pltpu.SMEM),
            scratch_shapes=[pltpu.SMEM((2,), jnp.float32)],
        ),
        compiler_params=pltpu.CompilerParams(
            dimension_semantics=("parallel", "arbitrary")),
    )(lsm, tgt2d)

    # Finish the mean over the batch in JAX (tiny [nb,1] array).
    return jnp.sum(partials) / jnp.float32(B)


def _reference(lsm, target, n_classes, smoothing):
    confidence = 1.0 - smoothing
    smooth_val = smoothing / (n_classes - 1)
    B, C = lsm.shape
    true_dist = jnp.full((B, C), smooth_val, dtype=jnp.float32)
    true_dist = true_dist.at[jnp.arange(B), target].set(confidence)
    return jnp.mean(jnp.sum(-true_dist * lsm, axis=-1))


if __name__ == "__main__":
    B, C = 8, 40
    smoothing = 0.1

    key = jax.random.PRNGKey(0)
    k_logits, k_tgt = jax.random.split(key)
    logits = jax.random.normal(k_logits, (B, C), dtype=jnp.float32)
    lsm = jax.nn.log_softmax(logits, axis=-1)          # module expects log-probs
    target = jax.random.randint(k_tgt, (B,), 0, C, dtype=jnp.int32)

    # f32 path
    loss = label_smoothing_loss(lsm, target, n_classes=C, smoothing=smoothing)
    loss = jax.block_until_ready(loss)
    ref = _reference(lsm, target, C, smoothing)
    assert jnp.allclose(loss, ref, rtol=1e-5, atol=1e-5), (loss, ref)

    # bf16 streaming path (native dtype into the kernel, f32 accumulation)
    lsm_bf16 = lsm.astype(jnp.bfloat16)
    loss_bf = label_smoothing_loss(lsm_bf16, target, n_classes=C,
                                   smoothing=smoothing)
    loss_bf = jax.block_until_ready(loss_bf)
    ref_bf = _reference(lsm_bf16.astype(jnp.float32), target, C, smoothing)
    assert jnp.allclose(loss_bf, ref_bf, rtol=1e-3, atol=1e-3), (loss_bf, ref_bf)

    print("KERNEL_OK")
</pallas_src>

<mosaic_0001>
module attributes {stable_mosaic.version = 11 : i64} {
  func.func @kernel(%arg0: i32, %arg1: i32, %arg2: memref<8x40xf32, #tpu.memory_space<vmem>>, %arg3: memref<8x1xi32, #tpu.memory_space<vmem>>, %arg4: memref<1x1xf32, #tpu.memory_space<smem>>, %arg5: memref<2xf32, #tpu.memory_space<smem>>) attributes {dimension_semantics = [#tpu.dimension_semantics<parallel>, #tpu.dimension_semantics<arbitrary>], iteration_bounds = array<i64: 1, 1>, scalar_prefetch = 0 : i64, scratch_operands = 1 : i64, tpu.core_type = #tpu.core_type<tc>, window_params = [{transform_indices = @transform_0, window_bounds = array<i64: 8, 40>}, {transform_indices = @transform_1, window_bounds = array<i64: 8, 1>}, {transform_indices = @transform_2, window_bounds = array<i64: 1, 1>}]} {
    %c0_i32 = arith.constant 0 : i32
    %0 = arith.cmpi eq, %arg1, %c0_i32 : i32
    %1 = arith.extui %0 : i1 to i32
    %c0_i32_0 = arith.constant 0 : i32
    %2 = arith.cmpi ne, %1, %c0_i32_0 : i32
    scf.if %2 {
      %cst_11 = arith.constant 0.000000e+00 : f32
      %c0_12 = arith.constant 0 : index
      %30 = memref.load %arg5[%c0_12] : memref<2xf32, #tpu.memory_space<smem>>
      memref.store %cst_11, %arg5[%c0_12] : memref<2xf32, #tpu.memory_space<smem>>
      %cst_13 = arith.constant 0.000000e+00 : f32
      %c1_14 = arith.constant 1 : index
      %31 = memref.load %arg5[%c1_14] : memref<2xf32, #tpu.memory_space<smem>>
      memref.store %cst_13, %arg5[%c1_14] : memref<2xf32, #tpu.memory_space<smem>>
    } else {
    }
    %c0 = arith.constant 0 : index
    %c0_1 = arith.constant 0 : index
    %3 = vector.load %arg2[%c0, %c0_1] : memref<8x40xf32, #tpu.memory_space<vmem>>, vector<8x40xf32>
    %c0_2 = arith.constant 0 : index
    %c0_3 = arith.constant 0 : index
    %4 = vector.load %arg3[%c0_2, %c0_3] : memref<8x1xi32, #tpu.memory_space<vmem>>, vector<8x1xi32>
    %5 = tpu.iota {dimensions = array<i32: 1>} : vector<8x40xi32>
    %c40_i32 = arith.constant 40 : i32
    %6 = arith.muli %arg1, %c40_i32 : i32
    %7 = vector.broadcast %6 : i32 to vector<8x40xi32>
    %8 = arith.addi %5, %7 : vector<8x40xi32>
    %c0_4 = arith.constant 0 : index
    %9 = memref.load %arg5[%c0_4] : memref<2xf32, #tpu.memory_space<smem>>
    %10 = vector.shape_cast %3 : vector<8x40xf32> to vector<1x8x40xf32>
    %cst = arith.constant dense<0.000000e+00> : vector<1xf32>
    %11 = vector.multi_reduction <add>, %10, %cst [1, 2] : vector<1x8x40xf32> to vector<1xf32>
    %12 = vector.shape_cast %11 : vector<1xf32> to vector<1x1x1xf32>
    %13 = vector.extract %12[0, 0, 0] : f32 from vector<1x1x1xf32>
    %14 = arith.addf %9, %13 : f32
    %c0_5 = arith.constant 0 : index
    %15 = memref.load %arg5[%c0_5] : memref<2xf32, #tpu.memory_space<smem>>
    memref.store %14, %arg5[%c0_5] : memref<2xf32, #tpu.memory_space<smem>>
    %c1 = arith.constant 1 : index
    %16 = memref.load %arg5[%c1] : memref<2xf32, #tpu.memory_space<smem>>
    %17 = vector.broadcast %4 : vector<8x1xi32> to vector<8x40xi32>
    %18 = arith.cmpi eq, %8, %17 : vector<8x40xi32>
    %cst_6 = arith.constant 0.000000e+00 : f32
    %19 = vector.broadcast %cst_6 : f32 to vector<8x40xf32>
    %20 = arith.select %18, %3, %19 : vector<8x40xi1>, vector<8x40xf32>
    %21 = vector.shape_cast %20 : vector<8x40xf32> to vector<1x8x40xf32>
    %cst_7 = arith.constant dense<0.000000e+00> : vector<1xf32>
    %22 = vector.multi_reduction <add>, %21, %cst_7 [1, 2] : vector<1x8x40xf32> to vector<1xf32>
    %23 = vector.shape_cast %22 : vector<1xf32> to vector<1x1x1xf32>
    %24 = vector.extract %23[0, 0, 0] : f32 from vector<1x1x1xf32>
    %25 = arith.addf %16, %24 : f32
    %c1_8 = arith.constant 1 : index
    %26 = memref.load %arg5[%c1_8] : memref<2xf32, #tpu.memory_space<smem>>
    memref.store %25, %arg5[%c1_8] : memref<2xf32, #tpu.memory_space<smem>>
    %c0_i32_9 = arith.constant 0 : i32
    %27 = arith.cmpi eq, %arg1, %c0_i32_9 : i32
    %28 = arith.extui %27 : i1 to i32
    %c0_i32_10 = arith.constant 0 : i32
    %29 = arith.cmpi ne, %28, %c0_i32_10 : i32
    scf.if %29 {
      %cst_11 = arith.constant 0.000000e+00 : f32
      %cst_12 = arith.constant 0.00256410264 : f32
      %30 = arith.subf %cst_11, %cst_12 : f32
      %c0_13 = arith.constant 0 : index
      %31 = memref.load %arg5[%c0_13] : memref<2xf32, #tpu.memory_space<smem>>
      %32 = arith.mulf %30, %31 : f32
      %c1_14 = arith.constant 1 : index
      %33 = memref.load %arg5[%c1_14] : memref<2xf32, #tpu.memory_space<smem>>
      %cst_15 = arith.constant 0.897435904 : f32
      %34 = arith.mulf %cst_15, %33 : f32
      %35 = arith.subf %32, %34 : f32
      %c0_16 = arith.constant 0 : index
      %c0_17 = arith.constant 0 : index
      %36 = memref.load %arg4[%c0_16, %c0_17] : memref<1x1xf32, #tpu.memory_space<smem>>
      memref.store %35, %arg4[%c0_16, %c0_17] : memref<1x1xf32, #tpu.memory_space<smem>>
    } else {
    }
    return
  }
  func.func @transform_0(%arg0: i32, %arg1: i32) -> (i32, i32) {
    %c0_i32 = arith.constant 0 : i32
    return %arg0, %arg1 : i32, i32
  }
  func.func @transform_1(%arg0: i32, %arg1: i32) -> (i32, i32) {
    %c0_i32 = arith.constant 0 : i32
    %c0_i32_0 = arith.constant 0 : i32
    return %arg0, %c0_i32 : i32, i32
  }
  func.func @transform_2(%arg0: i32, %arg1: i32) -> (i32, i32) {
    %c0_i32 = arith.constant 0 : i32
    %c0_i32_0 = arith.constant 0 : i32
    return %arg0, %c0_i32 : i32, i32
  }
}

</mosaic_0001>

<llo_original>
// kernel: tpu_custom_call.1
$region0: #{tpu_custom_call.1}
  #allocation0 [shape = 'u32[]', space=smem, size = 0x4, offset = 0x4, fixed_abs, tag = 'smem constant byte address 0x4 - core index']
  #allocation1 [shape = 'u32[144,128]{1,0:T(1,128)}', space=vmem, size = 0x12000, scoped, tag = 'internal scratch']
  #allocation2 [shape = 'f32[2]{0:T(128)}', space=smem, size = 0x200, scoped, tag = 'scratch operand']
  %s0 = inlined_call_operand.vmem [shape: f32[8,40], index: 0, kind: input, shape index: {}]
  %s1 = inlined_call_operand.vmem [shape: s32[8,1], index: 1, kind: input, shape index: {}]
  %s2 = inlined_call_operand.hbm [shape: f32[1,1], index: 2, kind: output, shape index: {}]
  %s3 = sld [smem:[#allocation0]]
  $region26: #{tpu_custom_call.1} parent=0
    _
  %s5 = ssub.s32 1, %s3
  %s6 = scalar_select 0, %s5, %s3
  $region1: #{tpu_custom_call.1} parent=0
    #allocation3 [shape = 'u8[512]{0}', space=smem, size = 0x200, scoped, tag = 'output window, operand 0, single buffered']
    #allocation4 [shape = 's32[1]{0}', space=sflag, size = 0x4, scoped, tag = 'scoped memory for tpu_custom_call.1']
    %7 = vsyncpa [#allocation4], 0
    // Predicated region
    $region2: #{tpu_custom_call.1} parent=1 // pred_check
      _
    $region3: #{tpu_custom_call.1} parent=1 // pred_check_branch
      %9 = sbr.rel (0) target = $region5
    $region4: #{tpu_custom_call.1} parent=1 // pred_region
      _
    $region5: #{tpu_custom_call.1} parent=1 // pred_fallthru
      _
    // Predicated region
    $region6: #{tpu_custom_call.1} parent=1 // pred_check
      _
    $region7: #{tpu_custom_call.1} parent=1 // pred_check_branch
      %11 = sbr.rel (0) target = $region9
    $region8: #{tpu_custom_call.1} parent=1 // pred_region
      _
    $region9: #{tpu_custom_call.1} parent=1 // pred_fallthru
      _
    %p12 = scmp.eq.s32.totalorder 0, 0
    // Predicated region
    $region10: #{tpu_custom_call.1} parent=1 // pred_check
      %p13 = pneg %p12
    $region11: #{tpu_custom_call.1} parent=1 // pred_check_branch
      %15 = sbr.rel (%p13) target = $region13
    $region12: #{tpu_custom_call.1} parent=1 // pred_region
      %s16 = scalar_lea.smem [#allocation2], 0
      %17 = sst [smem:[%s16]] 0.0
      %s18 = scalar_lea.smem [#allocation2], 1
      %19 = sst [smem:[%s18]] 0.0
    $region13: #{tpu_custom_call.1} parent=1 // pred_fallthru
      _
    %v20 = vld [vmem:[%s0] sm:$0xff]
    %v21 = vld [vmem:[%s1] sm:$0xff]
    %v22 = vlaneseq
    %v23 = vand.u32 %v22, 127
    %s24 = smul.u32 0, 40
    %v25 = vstv %s24
    %v26 = vadd.s32 %v23, %v25
    %s27 = sld [smem:[#allocation2]]
    %vm28 = vcmask 326656
    %v29 = vsel %vm28, %v20, 0.0
    %30 = vadd.xlane.f32.xlu0 %v29
    %v31 = vpop.xlane.xlu0 %30
    %v32 = vrot.slane %v31, 4
    %v33 = vadd.f32 %v31, %v32
    %v34 = vrot.slane %v33, 2
    %v35 = vadd.f32 %v33, %v34
    %v36 = vrot.slane %v35, 1
    %v37 = vadd.f32 %v35, %v36
    %s38 = vtos %v37
    %s39 = sadd.f32 %s27, %s38
    %s40 = scalar_lea.smem [#allocation2], 0
    %41 = sst [smem:[%s40]] %s39
    %s42 = sld [smem:[#allocation2 + $0x1]]
    %43 = vset.pattern.permute.xlu0 0
    %44 = vperm.xlu0 %43, %v21
    %v45 = vpop.permute.xlu0 %44
    %vm46 = vcmp.eq.s32.totalorder %v26, %v45
    %v47 = vsel %vm46, %v20, 0.0
    %v48 = vsel %vm28, %v47, 0.0
    %49 = vadd.xlane.f32.xlu0 %v48
    %v50 = vpop.xlane.xlu0 %49
    %v51 = vrot.slane %v50, 4
    %v52 = vadd.f32 %v50, %v51
    %v53 = vrot.slane %v52, 2
    %v54 = vadd.f32 %v52, %v53
    %v55 = vrot.slane %v54, 1
    %v56 = vadd.f32 %v54, %v55
    %s57 = vtos %v56
    %s58 = sadd.f32 %s42, %s57
    %s59 = scalar_lea.smem [#allocation2], 1
    %60 = sst [smem:[%s59]] %s58
    // Predicated region
    $region14: #{tpu_custom_call.1} parent=1 // pred_check
      %p61 = pneg %p12
    $region15: #{tpu_custom_call.1} parent=1 // pred_check_branch
      %63 = sbr.rel (%p61) target = $region17
    $region16: #{tpu_custom_call.1} parent=1 // pred_region
      %s64 = sld [smem:[#allocation2]]
      %s65 = smul.f32 %s64, -0.0025641026
      %s66 = sld [smem:[#allocation2 + $0x1]]
      %s67 = smul.f32 %s66, 0.8974359
      %s68 = ssub.f32 %s65, %s67
      %s69 = scalar_lea.smem [#allocation3], 0
      %70 = sst [smem:[%s69]] %s68
    $region17: #{tpu_custom_call.1} parent=1 // pred_fallthru
      _
    // Predicated region
    $region18: #{tpu_custom_call.1} parent=1 // pred_check
      _
    $region19: #{tpu_custom_call.1} parent=1 // pred_check_branch
      %72 = sbr.rel (0) target = $region21
    $region20: #{tpu_custom_call.1} parent=1 // pred_region
      %s74 = ssub.s32 16, 16
      %75 = vsyncadd [#allocation4], %s74
      %78 = dma.smem_to_hbm [#allocation3], 16, %s2, [#allocation4]
    $region21: #{tpu_custom_call.1} parent=1 // pred_fallthru
      _
    // Predicated region
    $region22: #{tpu_custom_call.1} parent=1 // pred_check
      _
    $region23: #{tpu_custom_call.1} parent=1 // pred_check_branch
      %80 = sbr.rel (0) target = $region25
    $region24: #{tpu_custom_call.1} parent=1 // pred_region
      %81 = dma.done [#allocation4], 16
    $region25: #{tpu_custom_call.1} parent=1 // pred_fallthru
      _
    %82 = sfence
    %83 = vsyncpa [#allocation4], 1

</llo_original>
